<compile_context>
chip_gen: v7x
topology: tpu7x:2x2x1
jax: 0.10.0
libtpu: 0.0.40
codegen_flags: <defaults>
</compile_context>

<pallas_src>
import functools

import numpy as np
import jax
import jax.numpy as jnp
from jax.experimental import pallas as pl
from jax.experimental.pallas import tpu as pltpu


def _normalize(mx: np.ndarray) -> np.ndarray:
    """Row-normalize a dense matrix (same as GCN_1.normalize)."""
    rowsum = np.array(mx.sum(1))
    r_inv = np.power(rowsum, -1.0).flatten()
    r_inv[np.isinf(r_inv)] = 0.0
    return np.diagflat(r_inv).dot(mx)


def _round_up(x: int, m: int) -> int:
    return ((x + m - 1) // m) * m


def _gcn_kernel(adj_ref, w_ref, b_ref, o_ref, *, vp):
    adj = adj_ref[...]                 # (Vp, Vp) f32, loaded once, reused twice
    w1 = w_ref[:vp, :]                 # (Vp, Dp) static ref slice (zero cost)
    w2 = w_ref[vp:, :]                 # (Dp, Dp)
    b = b_ref[...]                     # (2, Dp)
    b1 = b[0:1, :]
    b2 = b[1:2, :]

    # gcn1: x = eye(V) => x @ W1 == W1; fused bias-add + ReLU on the f32 VPU.
    h1 = jnp.maximum(
        jnp.dot(adj, w1, preferred_element_type=jnp.float32) + b1, 0.0)

    # TODO(synk): nn.Dropout(p=0.3) is identity in eval mode; training-mode
    # dropout with PyTorch-identical RNG is intentionally not implemented.

    # gcn2: out = adj @ (h1 @ W2) + b2
    s2 = jnp.dot(h1, w2, preferred_element_type=jnp.float32)
    o_ref[...] = jnp.dot(adj, s2, preferred_element_type=jnp.float32) + b2


def prepare_gcn_params(adj, w1, b1, w2, b2):
    """One-time (model-load) padding + coalescing into 3 lane-dense f32 buffers.

    Returns (adj_p (Vp,Vp), w_p (Vp+Dp,Dp) = [W1_pad; W2_pad], b_p (2,Dp),
    dims=(V, D, Vp, Dp)). Padding is zeros, so the real (V,D) output block is
    numerically identical to the unpadded computation.
    """
    V, D = w1.shape
    Vp = _round_up(max(V, 128), 128)
    Dp = _round_up(max(D, 128), 128)

    adj_p = jnp.zeros((Vp, Vp), jnp.float32).at[:V, :V].set(
        jnp.asarray(adj, jnp.float32))
    w1_p = jnp.zeros((Vp, Dp), jnp.float32).at[:V, :D].set(
        jnp.asarray(w1, jnp.float32))
    w2_p = jnp.zeros((Dp, Dp), jnp.float32).at[:D, :D].set(
        jnp.asarray(w2, jnp.float32))
    w_p = jnp.concatenate([w1_p, w2_p], axis=0)          # (Vp + Dp, Dp)

    b_p = jnp.zeros((2, Dp), jnp.float32)
    b_p = b_p.at[0, :D].set(jnp.asarray(b1, jnp.float32).reshape(-1))
    b_p = b_p.at[1, :D].set(jnp.asarray(b2, jnp.float32).reshape(-1))
    return adj_p, w_p, b_p, (V, D, Vp, Dp)


@functools.partial(jax.jit, static_argnames=("dims",))
def gcn_forward(adj_p, w_p, b_p, *, dims):
    """Per-call path: one pallas_call on pre-padded params + fused slice."""
    V, D, Vp, Dp = dims
    full2d = lambda shape: pl.BlockSpec(shape, lambda: (0, 0))

    # Advisory cost hint for the XLA scheduler.
    flops = 2 * Vp * Vp * Dp * 2 + 2 * Vp * Dp * Dp
    bytes_accessed = (Vp * Vp + (Vp + Dp) * Dp + 2 * Dp + Vp * Dp) * 4

    out_p = pl.pallas_call(
        functools.partial(_gcn_kernel, vp=Vp),
        out_shape=jax.ShapeDtypeStruct((Vp, Dp), jnp.float32),
        grid_spec=pltpu.PrefetchScalarGridSpec(
            num_scalar_prefetch=0,
            grid=(),
            in_specs=[
                full2d((Vp, Vp)),       # adj (lane-dense, 128x128)
                full2d((Vp + Dp, Dp)),  # W1 || W2 coalesced
                full2d((2, Dp)),        # b1 || b2 coalesced
            ],
            out_specs=full2d((Vp, Dp)),
        ),
        cost_estimate=pl.CostEstimate(
            flops=flops, transcendentals=0, bytes_accessed=bytes_accessed),
    )(adj_p, w_p, b_p)
    # Padded rows hold only the b2 bias and padded cols are exactly zero;
    # slice them off (fused into the jit'd call).
    return out_p[:V, :D]


if __name__ == "__main__":
    # Small, deterministic shapes consistent with the module.
    voc_size = 64
    emb_dim = 32

    key = jax.random.PRNGKey(0)
    k_adj, k_w1, k_b1, k_w2, k_b2 = jax.random.split(key, 5)

    # Synthetic binary adjacency, then GCN_1.__init__ preprocessing:
    # adj <- row_normalize(adj + I)
    adj_raw = (
        jax.random.uniform(k_adj, (voc_size, voc_size)) < 0.1
    ).astype(jnp.float32)
    adj_np = _normalize(np.asarray(adj_raw, dtype=np.float64) + np.eye(voc_size))
    adj = jnp.asarray(adj_np, dtype=jnp.float32)

    # GraphConvolution init: uniform(-stdv, stdv), stdv = 1/sqrt(out_features)
    stdv = 1.0 / np.sqrt(emb_dim)
    w1 = jax.random.uniform(
        k_w1, (voc_size, emb_dim), minval=-stdv, maxval=stdv, dtype=jnp.float32)
    b1 = jax.random.uniform(
        k_b1, (1, emb_dim), minval=-stdv, maxval=stdv, dtype=jnp.float32)
    w2 = jax.random.uniform(
        k_w2, (emb_dim, emb_dim), minval=-stdv, maxval=stdv, dtype=jnp.float32)
    b2 = jax.random.uniform(
        k_b2, (1, emb_dim), minval=-stdv, maxval=stdv, dtype=jnp.float32)

    # One-time param preparation (model load), then the cheap per-call path.
    adj_p, w_p, b_p, dims = prepare_gcn_params(adj, w1, b1, w2, b2)
    out = gcn_forward(adj_p, w_p, b_p, dims=dims)
    out = jax.block_until_ready(out)

    # float64 numpy reference (PyTorch forward in eval mode, x = eye(V)).
    adj64 = np.asarray(adj, np.float64)
    h1_ref = np.maximum(
        adj64 @ np.asarray(w1, np.float64) + np.asarray(b1, np.float64), 0.0)
    out_ref = adj64 @ (h1_ref @ np.asarray(w2, np.float64)) + np.asarray(
        b2, np.float64)
    np.testing.assert_allclose(
        np.asarray(out, np.float64), out_ref, rtol=2e-3, atol=2e-3)

    print("KERNEL_OK")
</pallas_src>

<mosaic_0001>
module attributes {stable_mosaic.version = 11 : i64} {
  func.func @_gcn_kernel(%arg0: memref<128x128xf32, #tpu.memory_space<vmem>>, %arg1: memref<256x128xf32, #tpu.memory_space<vmem>>, %arg2: memref<2x128xf32, #tpu.memory_space<vmem>>, %arg3: memref<128x128xf32, #tpu.memory_space<vmem>>) attributes {dimension_semantics = [], scalar_prefetch = 0 : i64, scratch_operands = 0 : i64, tpu.core_type = #tpu.core_type<tc>} {
    %c0 = arith.constant 0 : index
    %c0_0 = arith.constant 0 : index
    %0 = vector.load %arg0[%c0, %c0_0] : memref<128x128xf32, #tpu.memory_space<vmem>>, vector<128x128xf32>
    %c0_1 = arith.constant 0 : index
    %c0_2 = arith.constant 0 : index
    %1 = vector.load %arg1[%c0_1, %c0_2] : memref<256x128xf32, #tpu.memory_space<vmem>>, vector<128x128xf32>
    %c128 = arith.constant 128 : index
    %c0_3 = arith.constant 0 : index
    %2 = vector.load %arg1[%c128, %c0_3] : memref<256x128xf32, #tpu.memory_space<vmem>>, vector<128x128xf32>
    %c0_4 = arith.constant 0 : index
    %c0_5 = arith.constant 0 : index
    %3 = vector.load %arg2[%c0_4, %c0_5] : memref<2x128xf32, #tpu.memory_space<vmem>>, vector<2x128xf32>
    %4 = vector.extract_strided_slice %3 {offsets = [0, 0], sizes = [1, 128], strides = [1, 1]} : vector<2x128xf32> to vector<1x128xf32>
    %5 = vector.extract_strided_slice %3 {offsets = [1, 0], sizes = [1, 128], strides = [1, 1]} : vector<2x128xf32> to vector<1x128xf32>
    %cst = arith.constant dense<0.000000e+00> : vector<128x128xf32>
    %6 = tpu.matmul %0, %1, %cst {dimension_numbers = #tpu.dot_dimension_numbers<[1], [0], [0], [1], [0, 0, 1, 1], [], []>} : vector<128x128xf32>, vector<128x128xf32>, vector<128x128xf32> -> vector<128x128xf32>
    %7 = vector.broadcast %4 : vector<1x128xf32> to vector<128x128xf32>
    %8 = arith.addf %6, %7 : vector<128x128xf32>
    %cst_6 = arith.constant 0.000000e+00 : f32
    %9 = vector.broadcast %cst_6 : f32 to vector<128x128xf32>
    %10 = arith.maximumf %8, %9 : vector<128x128xf32>
    %cst_7 = arith.constant dense<0.000000e+00> : vector<128x128xf32>
    %11 = tpu.matmul %10, %2, %cst_7 {dimension_numbers = #tpu.dot_dimension_numbers<[1], [0], [0], [1], [0, 0, 1, 1], [], []>} : vector<128x128xf32>, vector<128x128xf32>, vector<128x128xf32> -> vector<128x128xf32>
    %cst_8 = arith.constant dense<0.000000e+00> : vector<128x128xf32>
    %12 = tpu.matmul %0, %11, %cst_8 {dimension_numbers = #tpu.dot_dimension_numbers<[1], [0], [0], [1], [0, 0, 1, 1], [], []>} : vector<128x128xf32>, vector<128x128xf32>, vector<128x128xf32> -> vector<128x128xf32>
    %13 = vector.broadcast %5 : vector<1x128xf32> to vector<128x128xf32>
    %14 = arith.addf %12, %13 : vector<128x128xf32>
    %c0_9 = arith.constant 0 : index
    %c0_10 = arith.constant 0 : index
    %15 = vector.load %arg3[%c0_9, %c0_10] : memref<128x128xf32, #tpu.memory_space<vmem>>, vector<128x128xf32>
    tpu.vector_store %arg3[%c0_9, %c0_10], %14 {strides = array<i32>} : memref<128x128xf32, #tpu.memory_space<vmem>>, vector<128x128xf32>,
    return
  }
}

</mosaic_0001>

<llo_original>
// kernel: gcn_forward.1
$region0: #{gcn_forward.1}
  #allocation0 [shape = 'u32[]', space=smem, size = 0x4, offset = 0x4, fixed_abs, tag = 'smem constant byte address 0x4 - core index']
  #allocation1 [shape = 'u32[144,128]{1,0:T(1,128)}', space=vmem, size = 0x12000, scoped, tag = 'internal scratch']
  %s0 = inlined_call_operand.hbm [shape: f32[128,128], index: 0, kind: input, shape index: {}]
  %s1 = inlined_call_operand.hbm [shape: f32[256,128], index: 1, kind: input, shape index: {}]
  %s2 = inlined_call_operand.vmem [shape: f32[2,128], index: 2, kind: input, shape index: {}]
  %s3 = inlined_call_operand.vmem [shape: f32[128,128], index: 3, kind: output, shape index: {}]
  %s4 = sld [smem:[#allocation0]]
  $region30: #{gcn_forward.1} parent=0
    _
  %s6 = ssub.s32 1, %s4
  %s7 = scalar_select 0, %s6, %s4
  $region1: #{gcn_forward.1} parent=0
    #allocation2 [shape = 'u8[65536]{0}', space=vmem, size = 0x10000, scoped, tag = 'input window, operand 0, single buffered']
    #allocation3 [shape = 's32[1]{0}', space=sflag, size = 0x4, scoped, tag = 'scoped memory for gcn_forward.1']
    #allocation4 [shape = 'u8[131072]{0}', space=vmem, size = 0x20000, scoped, tag = 'input window, operand 1, single buffered']
    #allocation5 [shape = 's32[1]{0}', space=sflag, size = 0x4, scoped, tag = 'scoped memory for gcn_forward.1']
    %8 = vsyncpa [#allocation3], 0
    %9 = vsyncpa [#allocation5], 0
    // Predicated region
    $region2: #{gcn_forward.1} parent=1 // pred_check
      _
    $region3: #{gcn_forward.1} parent=1 // pred_check_branch
      %11 = sbr.rel (0) target = $region5
    $region4: #{gcn_forward.1} parent=1 // pred_region
      %s13 = ssub.s32 2048, 2048
      %14 = vsyncadd [#allocation3], %s13
      %s15 = sshll.u32 [#allocation2], 4
      %s16 = int_to_ptr.vmem [resolvable:$true] %s15
      %21 = dma.hbm_to_vmem [thread:$0]  %s0, 2048, %s16, [#allocation3], 128, 128, 8
    $region5: #{gcn_forward.1} parent=1 // pred_fallthru
      _
    // Predicated region
    $region6: #{gcn_forward.1} parent=1 // pred_check
      _
    $region7: #{gcn_forward.1} parent=1 // pred_check_branch
      %23 = sbr.rel (0) target = $region9
    $region8: #{gcn_forward.1} parent=1 // pred_region
      %s25 = ssub.s32 4096, 4096
      %26 = vsyncadd [#allocation5], %s25
      %s27 = sshll.u32 [#allocation4], 4
      %s28 = int_to_ptr.vmem [resolvable:$true] %s27
      %33 = dma.hbm_to_vmem [thread:$0]  %s1, 4096, %s28, [#allocation5], 128, 128, 8
    $region9: #{gcn_forward.1} parent=1 // pred_fallthru
      _
    // Predicated region
    $region10: #{gcn_forward.1} parent=1 // pred_check
      _
    $region11: #{gcn_forward.1} parent=1 // pred_check_branch
      %35 = sbr.rel (0) target = $region13
    $region12: #{gcn_forward.1} parent=1 // pred_region
      _
    $region13: #{gcn_forward.1} parent=1 // pred_fallthru
      _
    // Predicated region
    $region14: #{gcn_forward.1} parent=1 // pred_check
      _
    $region15: #{gcn_forward.1} parent=1 // pred_check_branch
      %37 = sbr.rel (0) target = $region17
    $region16: #{gcn_forward.1} parent=1 // pred_region
      %38 = dma.done [#allocation3], 2048
    $region17: #{gcn_forward.1} parent=1 // pred_fallthru
      _
    // Predicated region
    $region18: #{gcn_forward.1} parent=1 // pred_check
      _
    $region19: #{gcn_forward.1} parent=1 // pred_check_branch
      %40 = sbr.rel (0) target = $region21
    $region20: #{gcn_forward.1} parent=1 // pred_region
      %41 = dma.done [#allocation5], 4096
    $region21: #{gcn_forward.1} parent=1 // pred_fallthru
      _
    %v42 = vld [vmem:[#allocation2] sm:$0xff]
    %v43 = vld [vmem:[#allocation2 + $0x8] sm:$0xff]
    %v44 = vld [vmem:[#allocation2 + $0x10] sm:$0xff]
    %v45 = vld [vmem:[#allocation2 + $0x18] sm:$0xff]
    %v46 = vld [vmem:[#allocation2 + $0x20] sm:$0xff]
    %v47 = vld [vmem:[#allocation2 + $0x28] sm:$0xff]
    %v48 = vld [vmem:[#allocation2 + $0x30] sm:$0xff]
    %v49 = vld [vmem:[#allocation2 + $0x38] sm:$0xff]
    %v50 = vld [vmem:[#allocation2 + $0x40] sm:$0xff]
    %v51 = vld [vmem:[#allocation2 + $0x48] sm:$0xff]
    %v52 = vld [vmem:[#allocation2 + $0x50] sm:$0xff]
    %v53 = vld [vmem:[#allocation2 + $0x58] sm:$0xff]
    %v54 = vld [vmem:[#allocation2 + $0x60] sm:$0xff]
    %v55 = vld [vmem:[#allocation2 + $0x68] sm:$0xff]
    %v56 = vld [vmem:[#allocation2 + $0x70] sm:$0xff]
    %v57 = vld [vmem:[#allocation2 + $0x78] sm:$0xff]
    %v58 = vld [vmem:[#allocation4] sm:$0xff]
    %v59 = vld [vmem:[#allocation4 + $0x8] sm:$0xff]
    %v60 = vld [vmem:[#allocation4 + $0x10] sm:$0xff]
    %v61 = vld [vmem:[#allocation4 + $0x18] sm:$0xff]
    %v62 = vld [vmem:[#allocation4 + $0x20] sm:$0xff]
    %v63 = vld [vmem:[#allocation4 + $0x28] sm:$0xff]
    %v64 = vld [vmem:[#allocation4 + $0x30] sm:$0xff]
    %v65 = vld [vmem:[#allocation4 + $0x38] sm:$0xff]
    %v66 = vld [vmem:[#allocation4 + $0x40] sm:$0xff]
    %v67 = vld [vmem:[#allocation4 + $0x48] sm:$0xff]
    %v68 = vld [vmem:[#allocation4 + $0x50] sm:$0xff]
    %v69 = vld [vmem:[#allocation4 + $0x58] sm:$0xff]
    %v70 = vld [vmem:[#allocation4 + $0x60] sm:$0xff]
    %v71 = vld [vmem:[#allocation4 + $0x68] sm:$0xff]
    %v72 = vld [vmem:[#allocation4 + $0x70] sm:$0xff]
    %v73 = vld [vmem:[#allocation4 + $0x78] sm:$0xff]
    %v74 = vld [vmem:[#allocation4 + $0x80] sm:$0xff]
    %v75 = vld [vmem:[#allocation4 + $0x88] sm:$0xff]
    %v76 = vld [vmem:[#allocation4 + $0x90] sm:$0xff]
    %v77 = vld [vmem:[#allocation4 + $0x98] sm:$0xff]
    %v78 = vld [vmem:[#allocation4 + $0xa0] sm:$0xff]
    %v79 = vld [vmem:[#allocation4 + $0xa8] sm:$0xff]
    %v80 = vld [vmem:[#allocation4 + $0xb0] sm:$0xff]
    %v81 = vld [vmem:[#allocation4 + $0xb8] sm:$0xff]
    %v82 = vld [vmem:[#allocation4 + $0xc0] sm:$0xff]
    %v83 = vld [vmem:[#allocation4 + $0xc8] sm:$0xff]
    %v84 = vld [vmem:[#allocation4 + $0xd0] sm:$0xff]
    %v85 = vld [vmem:[#allocation4 + $0xd8] sm:$0xff]
    %v86 = vld [vmem:[#allocation4 + $0xe0] sm:$0xff]
    %v87 = vld [vmem:[#allocation4 + $0xe8] sm:$0xff]
    %v88 = vld [vmem:[#allocation4 + $0xf0] sm:$0xff]
    %v89 = vld [vmem:[#allocation4 + $0xf8] sm:$0xff]
    %v90 = vld [vmem:[%s2] sm:$0x3]
    %v91 = vlaneseq
    %v92 = vshrl.u32 %v91, 7
    %v93 = vsub.s32 0, %v92
    %v94 = vrot.slane %v90, %v93
    %95 = vmatprep.subr.mxu0 0.0
    %96 = vmatpush1.msra.mxu0 %v58
    %97 = vmatprep.subr.mxu0 0.0
    %98 = vmatpush1.msra.mxu0 %v59
    %99 = vmatprep.subr.mxu0 0.0
    %100 = vmatpush1.msra.mxu0 %v60
    %101 = vmatprep.subr.mxu0 0.0
    %102 = vmatpush1.msra.mxu0 %v61
    %103 = vmatprep.subr.mxu0 0.0
    %104 = vmatpush1.msra.mxu0 %v62
    %105 = vmatprep.subr.mxu0 0.0
    %106 = vmatpush1.msra.mxu0 %v63
    %107 = vmatprep.subr.mxu0 0.0
    %108 = vmatpush1.msra.mxu0 %v64
    %109 = vmatprep.subr.mxu0 0.0
    %110 = vmatpush1.msra.mxu0 %v65
    %111 = vmatprep.subr.mxu0 0.0
    %112 = vmatpush1.msra.mxu0 %v66
    %113 = vmatprep.subr.mxu0 0.0
    %114 = vmatpush1.msra.mxu0 %v67
    %115 = vmatprep.subr.mxu0 0.0
    %116 = vmatpush1.msra.mxu0 %v68
    %117 = vmatprep.subr.mxu0 0.0
    %118 = vmatpush1.msra.mxu0 %v69
    %119 = vmatprep.subr.mxu0 0.0
    %120 = vmatpush1.msra.mxu0 %v70
    %121 = vmatprep.subr.mxu0 0.0
    %122 = vmatpush1.msra.mxu0 %v71
    %123 = vmatprep.subr.mxu0 0.0
    %124 = vmatpush1.msra.mxu0 %v72
    %125 = vmatprep.subr.mxu0 0.0
    %126 = vmatpush1.msra.mxu0 %v73
    %127 = vmatprep.subr.mxu0 0.0
    %128 = vmatpush1.msra.mxu0 0.0
    %129 = vmatprep.subr.mxu0 0.0
    %130 = vmatpush1.msra.mxu0 0.0
    %131 = vmatprep.subr.mxu0 0.0
    %132 = vmatpush1.msra.mxu0 0.0
    %133 = vmatprep.subr.mxu0 0.0
    %134 = vmatpush1.msra.mxu0 0.0
    %135 = vmatprep.subr.mxu0 0.0
    %136 = vmatpush1.msra.mxu0 0.0
    %137 = vmatprep.subr.mxu0 0.0
    %138 = vmatpush1.msra.mxu0 0.0
    %139 = vmatprep.subr.mxu0 0.0
    %140 = vmatpush1.msra.mxu0 0.0
    %141 = vmatprep.subr.mxu0 0.0
    %142 = vmatpush1.msra.mxu0 0.0
    %143 = vmatprep.subr.mxu0 0.0
    %144 = vmatpush1.msra.mxu0 0.0
    %145 = vmatprep.subr.mxu0 0.0
    %146 = vmatpush1.msra.mxu0 0.0
    %147 = vmatprep.subr.mxu0 0.0
    %148 = vmatpush1.msra.mxu0 0.0
    %149 = vmatprep.subr.mxu0 0.0
    %150 = vmatpush1.msra.mxu0 0.0
    %151 = vmatprep.subr.mxu0 0.0
    %152 = vmatpush1.msra.mxu0 0.0
    %153 = vmatprep.subr.mxu0 0.0
    %154 = vmatpush1.msra.mxu0 0.0
    %155 = vmatprep.subr.mxu0 0.0
    %156 = vmatpush1.msra.mxu0 0.0
    %157 = vmatprep.subr.mxu0 0.0
    %158 = vmatpush1.msra.mxu0 0.0
    %159 = vmatprep.mubr.f32.mxu0 0.0
    %160 = vmatmul.mubr.f32.gmra.mrb[0].mxu0 %v42
    %v161 = vpop.f32.mrb[0].mxu0
    %v162 = vadd.f32 %v94, %v161
    %v163 = vpop.f32.mrb[0].mxu0
    %164 = vmatprep.mubr.f32.mxu0 0.0
    %165 = vmatmul.mubr.f32.gmra.mrb[0].mxu0 %v43
    %v166 = vpop.f32.mrb[0].mxu0
    %v167 = vadd.f32 %v94, %v166
    %v168 = vpop.f32.mrb[0].mxu0
    %169 = vmatprep.mubr.f32.mxu0 0.0
    %170 = vmatmul.mubr.f32.gmra.mrb[0].mxu0 %v44
    %v171 = vpop.f32.mrb[0].mxu0
    %v172 = vadd.f32 %v94, %v171
    %v173 = vpop.f32.mrb[0].mxu0
    %174 = vmatprep.mubr.f32.mxu0 0.0
    %175 = vmatmul.mubr.f32.gmra.mrb[0].mxu0 %v45
    %v176 = vpop.f32.mrb[0].mxu0
    %v177 = vadd.f32 %v94, %v176
    %v178 = vpop.f32.mrb[0].mxu0
    %179 = vmatprep.mubr.f32.mxu0 0.0
    %180 = vmatmul.mubr.f32.gmra.mrb[0].mxu0 %v46
    %v181 = vpop.f32.mrb[0].mxu0
    %v182 = vadd.f32 %v94, %v181
    %v183 = vpop.f32.mrb[0].mxu0
    %184 = vmatprep.mubr.f32.mxu0 0.0
    %185 = vmatmul.mubr.f32.gmra.mrb[0].mxu0 %v47
    %v186 = vpop.f32.mrb[0].mxu0
    %v187 = vadd.f32 %v94, %v186
    %v188 = vpop.f32.mrb[0].mxu0
    %189 = vmatprep.mubr.f32.mxu0 0.0
    %190 = vmatmul.mubr.f32.gmra.mrb[0].mxu0 %v48
    %v191 = vpop.f32.mrb[0].mxu0
    %v192 = vadd.f32 %v94, %v191
    %v193 = vpop.f32.mrb[0].mxu0
    %194 = vmatprep.mubr.f32.mxu0 0.0
    %195 = vmatmul.mubr.f32.gmra.mrb[0].mxu0 %v49
    %v196 = vpop.f32.mrb[0].mxu0
    %v197 = vadd.f32 %v94, %v196
    %v198 = vpop.f32.mrb[0].mxu0
    %199 = vmatprep.mubr.f32.mxu0 0.0
    %200 = vmatmul.mubr.f32.gmra.mrb[0].mxu0 %v50
    %v201 = vpop.f32.mrb[0].mxu0
    %v202 = vadd.f32 %v94, %v201
    %v203 = vpop.f32.mrb[0].mxu0
    %204 = vmatprep.mubr.f32.mxu0 0.0
    %205 = vmatmul.mubr.f32.gmra.mrb[0].mxu0 %v51
    %v206 = vpop.f32.mrb[0].mxu0
    %v207 = vadd.f32 %v94, %v206
    %v208 = vpop.f32.mrb[0].mxu0
    %209 = vmatprep.mubr.f32.mxu0 0.0
    %210 = vmatmul.mubr.f32.gmra.mrb[0].mxu0 %v52
    %v211 = vpop.f32.mrb[0].mxu0
    %v212 = vadd.f32 %v94, %v211
    %v213 = vpop.f32.mrb[0].mxu0
    %214 = vmatprep.mubr.f32.mxu0 0.0
    %215 = vmatmul.mubr.f32.gmra.mrb[0].mxu0 %v53
    %v216 = vpop.f32.mrb[0].mxu0
    %v217 = vadd.f32 %v94, %v216
    %v218 = vpop.f32.mrb[0].mxu0
    %219 = vmatprep.mubr.f32.mxu0 0.0
    %220 = vmatmul.mubr.f32.gmra.mrb[0].mxu0 %v54
    %v221 = vpop.f32.mrb[0].mxu0
    %v222 = vadd.f32 %v94, %v221
    %v223 = vpop.f32.mrb[0].mxu0
    %224 = vmatprep.mubr.f32.mxu0 0.0
    %225 = vmatmul.mubr.f32.gmra.mrb[0].mxu0 %v55
    %v226 = vpop.f32.mrb[0].mxu0
    %v227 = vadd.f32 %v94, %v226
    %v228 = vpop.f32.mrb[0].mxu0
    %229 = vmatprep.mubr.f32.mxu0 0.0
    %230 = vmatmul.mubr.f32.gmra.mrb[0].mxu0 %v56
    %v231 = vpop.f32.mrb[0].mxu0
    %v232 = vadd.f32 %v94, %v231
    %v233 = vpop.f32.mrb[0].mxu0
    %234 = vmatprep.mubr.f32.mxu0 0.0
    %235 = vmatmul.mubr.f32.gmra.mrb[0].mxu0 %v57
    %v236 = vpop.f32.mrb[0].mxu0
    %v237 = vadd.f32 %v94, %v236
    %v238 = vpop.f32.mrb[0].mxu0
    %239 = vdwg.mxu0
    %v240 = vmax.f32 %v162, 0.0
    %v241 = vmax.f32 %v167, 0.0
    %v242 = vmax.f32 %v172, 0.0
    %v243 = vmax.f32 %v177, 0.0
    %v244 = vmax.f32 %v182, 0.0
    %v245 = vmax.f32 %v187, 0.0
    %v246 = vmax.f32 %v192, 0.0
    %v247 = vmax.f32 %v197, 0.0
    %v248 = vmax.f32 %v202, 0.0
    %v249 = vmax.f32 %v207, 0.0
    %v250 = vmax.f32 %v212, 0.0
    %v251 = vmax.f32 %v217, 0.0
    %v252 = vmax.f32 %v222, 0.0
    %v253 = vmax.f32 %v227, 0.0
    %v254 = vmax.f32 %v232, 0.0
    %v255 = vmax.f32 %v237, 0.0
    %256 = vmatprep.subr.mxu0 0.0
    %257 = vmatpush1.msra.mxu0 %v74
    %258 = vmatprep.subr.mxu0 0.0
    %259 = vmatpush1.msra.mxu0 %v75
    %260 = vmatprep.subr.mxu0 0.0
    %261 = vmatpush1.msra.mxu0 %v76
    %262 = vmatprep.subr.mxu0 0.0
    %263 = vmatpush1.msra.mxu0 %v77
    %264 = vmatprep.subr.mxu0 0.0
    %265 = vmatpush1.msra.mxu0 %v78
    %266 = vmatprep.subr.mxu0 0.0
    %267 = vmatpush1.msra.mxu0 %v79
    %268 = vmatprep.subr.mxu0 0.0
    %269 = vmatpush1.msra.mxu0 %v80
    %270 = vmatprep.subr.mxu0 0.0
    %271 = vmatpush1.msra.mxu0 %v81
    %272 = vmatprep.subr.mxu0 0.0
    %273 = vmatpush1.msra.mxu0 %v82
    %274 = vmatprep.subr.mxu0 0.0
    %275 = vmatpush1.msra.mxu0 %v83
    %276 = vmatprep.subr.mxu0 0.0
    %277 = vmatpush1.msra.mxu0 %v84
    %278 = vmatprep.subr.mxu0 0.0
    %279 = vmatpush1.msra.mxu0 %v85
    %280 = vmatprep.subr.mxu0 0.0
    %281 = vmatpush1.msra.mxu0 %v86
    %282 = vmatprep.subr.mxu0 0.0
    %283 = vmatpush1.msra.mxu0 %v87
    %284 = vmatprep.subr.mxu0 0.0
    %285 = vmatpush1.msra.mxu0 %v88
    %286 = vmatprep.subr.mxu0 0.0
    %287 = vmatpush1.msra.mxu0 %v89
    %288 = vmatprep.subr.mxu0 0.0
    %289 = vmatpush1.msra.mxu0 0.0
    %290 = vmatprep.subr.mxu0 0.0
    %291 = vmatpush1.msra.mxu0 0.0
    %292 = vmatprep.subr.mxu0 0.0
    %293 = vmatpush1.msra.mxu0 0.0
    %294 = vmatprep.subr.mxu0 0.0
    %295 = vmatpush1.msra.mxu0 0.0
    %296 = vmatprep.subr.mxu0 0.0
    %297 = vmatpush1.msra.mxu0 0.0
    %298 = vmatprep.subr.mxu0 0.0
    %299 = vmatpush1.msra.mxu0 0.0
    %300 = vmatprep.subr.mxu0 0.0
    %301 = vmatpush1.msra.mxu0 0.0
    %302 = vmatprep.subr.mxu0 0.0
    %303 = vmatpush1.msra.mxu0 0.0
    %304 = vmatprep.subr.mxu0 0.0
    %305 = vmatpush1.msra.mxu0 0.0
    %306 = vmatprep.subr.mxu0 0.0
    %307 = vmatpush1.msra.mxu0 0.0
    %308 = vmatprep.subr.mxu0 0.0
    %309 = vmatpush1.msra.mxu0 0.0
    %310 = vmatprep.subr.mxu0 0.0
    %311 = vmatpush1.msra.mxu0 0.0
    %312 = vmatprep.subr.mxu0 0.0
    %313 = vmatpush1.msra.mxu0 0.0
    %314 = vmatprep.subr.mxu0 0.0
    %315 = vmatpush1.msra.mxu0 0.0
    %316 = vmatprep.subr.mxu0 0.0
    %317 = vmatpush1.msra.mxu0 0.0
    %318 = vmatprep.subr.mxu0 0.0
    %319 = vmatpush1.msra.mxu0 0.0
    %320 = vmatprep.mubr.f32.mxu0 0.0
    %321 = vmatmul.mubr.f32.gmra.mrb[0].mxu0 %v240
    %v322 = vpop.f32.mrb[0].mxu0
    %v323 = vadd.f32 0.0, %v322
    %v324 = vpop.f32.mrb[0].mxu0
    %325 = vmatprep.mubr.f32.mxu0 0.0
    %326 = vmatmul.mubr.f32.gmra.mrb[0].mxu0 %v241
    %v327 = vpop.f32.mrb[0].mxu0
    %v328 = vadd.f32 0.0, %v327
    %v329 = vpop.f32.mrb[0].mxu0
    %330 = vmatprep.mubr.f32.mxu0 0.0
    %331 = vmatmul.mubr.f32.gmra.mrb[0].mxu0 %v242
    %v332 = vpop.f32.mrb[0].mxu0
    %v333 = vadd.f32 0.0, %v332
    %v334 = vpop.f32.mrb[0].mxu0
    %335 = vmatprep.mubr.f32.mxu0 0.0
    %336 = vmatmul.mubr.f32.gmra.mrb[0].mxu0 %v243
    %v337 = vpop.f32.mrb[0].mxu0
    %v338 = vadd.f32 0.0, %v337
    %v339 = vpop.f32.mrb[0].mxu0
    %340 = vmatprep.mubr.f32.mxu0 0.0
    %341 = vmatmul.mubr.f32.gmra.mrb[0].mxu0 %v244
    %v342 = vpop.f32.mrb[0].mxu0
    %v343 = vadd.f32 0.0, %v342
    %v344 = vpop.f32.mrb[0].mxu0
    %345 = vmatprep.mubr.f32.mxu0 0.0
    %346 = vmatmul.mubr.f32.gmra.mrb[0].mxu0 %v245
    %v347 = vpop.f32.mrb[0].mxu0
    %v348 = vadd.f32 0.0, %v347
    %v349 = vpop.f32.mrb[0].mxu0
    %350 = vmatprep.mubr.f32.mxu0 0.0
    %351 = vmatmul.mubr.f32.gmra.mrb[0].mxu0 %v246
    %v352 = vpop.f32.mrb[0].mxu0
    %v353 = vadd.f32 0.0, %v352
    %v354 = vpop.f32.mrb[0].mxu0
    %355 = vmatprep.mubr.f32.mxu0 0.0
    %356 = vmatmul.mubr.f32.gmra.mrb[0].mxu0 %v247
    %v357 = vpop.f32.mrb[0].mxu0
    %v358 = vadd.f32 0.0, %v357
    %v359 = vpop.f32.mrb[0].mxu0
    %360 = vmatprep.mubr.f32.mxu0 0.0
    %361 = vmatmul.mubr.f32.gmra.mrb[0].mxu0 %v248
    %v362 = vpop.f32.mrb[0].mxu0
    %v363 = vadd.f32 0.0, %v362
    %v364 = vpop.f32.mrb[0].mxu0
    %365 = vmatprep.mubr.f32.mxu0 0.0
    %366 = vmatmul.mubr.f32.gmra.mrb[0].mxu0 %v249
    %v367 = vpop.f32.mrb[0].mxu0
    %v368 = vadd.f32 0.0, %v367
    %v369 = vpop.f32.mrb[0].mxu0
    %370 = vmatprep.mubr.f32.mxu0 0.0
    %371 = vmatmul.mubr.f32.gmra.mrb[0].mxu0 %v250
    %v372 = vpop.f32.mrb[0].mxu0
    %v373 = vadd.f32 0.0, %v372
    %v374 = vpop.f32.mrb[0].mxu0
    %375 = vmatprep.mubr.f32.mxu0 0.0
    %376 = vmatmul.mubr.f32.gmra.mrb[0].mxu0 %v251
    %v377 = vpop.f32.mrb[0].mxu0
    %v378 = vadd.f32 0.0, %v377
    %v379 = vpop.f32.mrb[0].mxu0
    %380 = vmatprep.mubr.f32.mxu0 0.0
    %381 = vmatmul.mubr.f32.gmra.mrb[0].mxu0 %v252
    %v382 = vpop.f32.mrb[0].mxu0
    %v383 = vadd.f32 0.0, %v382
    %v384 = vpop.f32.mrb[0].mxu0
    %385 = vmatprep.mubr.f32.mxu0 0.0
    %386 = vmatmul.mubr.f32.gmra.mrb[0].mxu0 %v253
    %v387 = vpop.f32.mrb[0].mxu0
    %v388 = vadd.f32 0.0, %v387
    %v389 = vpop.f32.mrb[0].mxu0
    %390 = vmatprep.mubr.f32.mxu0 0.0
    %391 = vmatmul.mubr.f32.gmra.mrb[0].mxu0 %v254
    %v392 = vpop.f32.mrb[0].mxu0
    %v393 = vadd.f32 0.0, %v392
    %v394 = vpop.f32.mrb[0].mxu0
    %395 = vmatprep.mubr.f32.mxu0 0.0
    %396 = vmatmul.mubr.f32.gmra.mrb[0].mxu0 %v255
    %v397 = vpop.f32.mrb[0].mxu0
    %v398 = vadd.f32 0.0, %v397
    %v399 = vpop.f32.mrb[0].mxu0
    %400 = vdwg.mxu0
    %v401 = vlaneseq
    %v402 = vshrl.u32 %v401, 7
    %v403 = vsub.s32 1, %v402
    %v404 = vrot.slane %v90, %v403
    %405 = vmatprep.subr.mxu0 0.0
    %406 = vmatpush1.msra.mxu0 %v323
    %407 = vmatprep.subr.mxu0 0.0
    %408 = vmatpush1.msra.mxu0 %v328
    %409 = vmatprep.subr.mxu0 0.0
    %410 = vmatpush1.msra.mxu0 %v333
    %411 = vmatprep.subr.mxu0 0.0
    %412 = vmatpush1.msra.mxu0 %v338
    %413 = vmatprep.subr.mxu0 0.0
    %414 = vmatpush1.msra.mxu0 %v343
    %415 = vmatprep.subr.mxu0 0.0
    %416 = vmatpush1.msra.mxu0 %v348
    %417 = vmatprep.subr.mxu0 0.0
    %418 = vmatpush1.msra.mxu0 %v353
    %419 = vmatprep.subr.mxu0 0.0
    %420 = vmatpush1.msra.mxu0 %v358
    %421 = vmatprep.subr.mxu0 0.0
    %422 = vmatpush1.msra.mxu0 %v363
    %423 = vmatprep.subr.mxu0 0.0
    %424 = vmatpush1.msra.mxu0 %v368
    %425 = vmatprep.subr.mxu0 0.0
    %426 = vmatpush1.msra.mxu0 %v373
    %427 = vmatprep.subr.mxu0 0.0
    %428 = vmatpush1.msra.mxu0 %v378
    %429 = vmatprep.subr.mxu0 0.0
    %430 = vmatpush1.msra.mxu0 %v383
    %431 = vmatprep.subr.mxu0 0.0
    %432 = vmatpush1.msra.mxu0 %v388
    %433 = vmatprep.subr.mxu0 0.0
    %434 = vmatpush1.msra.mxu0 %v393
    %435 = vmatprep.subr.mxu0 0.0
    %436 = vmatpush1.msra.mxu0 %v398
    %437 = vmatprep.subr.mxu0 0.0
    %438 = vmatpush1.msra.mxu0 0.0
    %439 = vmatprep.subr.mxu0 0.0
    %440 = vmatpush1.msra.mxu0 0.0
    %441 = vmatprep.subr.mxu0 0.0
    %442 = vmatpush1.msra.mxu0 0.0
    %443 = vmatprep.subr.mxu0 0.0
    %444 = vmatpush1.msra.mxu0 0.0
    %445 = vmatprep.subr.mxu0 0.0
    %446 = vmatpush1.msra.mxu0 0.0
    %447 = vmatprep.subr.mxu0 0.0
    %448 = vmatpush1.msra.mxu0 0.0
    %449 = vmatprep.subr.mxu0 0.0
    %450 = vmatpush1.msra.mxu0 0.0
    %451 = vmatprep.subr.mxu0 0.0
    %452 = vmatpush1.msra.mxu0 0.0
    %453 = vmatprep.subr.mxu0 0.0
    %454 = vmatpush1.msra.mxu0 0.0
    %455 = vmatprep.subr.mxu0 0.0
    %456 = vmatpush1.msra.mxu0 0.0
    %457 = vmatprep.subr.mxu0 0.0
    %458 = vmatpush1.msra.mxu0 0.0
    %459 = vmatprep.subr.mxu0 0.0
    %460 = vmatpush1.msra.mxu0 0.0
    %461 = vmatprep.subr.mxu0 0.0
    %462 = vmatpush1.msra.mxu0 0.0
    %463 = vmatprep.subr.mxu0 0.0
    %464 = vmatpush1.msra.mxu0 0.0
    %465 = vmatprep.subr.mxu0 0.0
    %466 = vmatpush1.msra.mxu0 0.0
    %467 = vmatprep.subr.mxu0 0.0
    %468 = vmatpush1.msra.mxu0 0.0
    %469 = vmatprep.mubr.f32.mxu0 0.0
    %470 = vmatmul.mubr.f32.gmra.mrb[0].mxu0 %v42
    %v471 = vpop.f32.mrb[0].mxu0
    %v472 = vadd.f32 %v404, %v471
    %v473 = vpop.f32.mrb[0].mxu0
    %474 = vmatprep.mubr.f32.mxu0 0.0
    %475 = vmatmul.mubr.f32.gmra.mrb[0].mxu0 %v43
    %v476 = vpop.f32.mrb[0].mxu0
    %v477 = vadd.f32 %v404, %v476
    %v478 = vpop.f32.mrb[0].mxu0
    %479 = vmatprep.mubr.f32.mxu0 0.0
    %480 = vmatmul.mubr.f32.gmra.mrb[0].mxu0 %v44
    %v481 = vpop.f32.mrb[0].mxu0
    %v482 = vadd.f32 %v404, %v481
    %v483 = vpop.f32.mrb[0].mxu0
    %484 = vmatprep.mubr.f32.mxu0 0.0
    %485 = vmatmul.mubr.f32.gmra.mrb[0].mxu0 %v45
    %v486 = vpop.f32.mrb[0].mxu0
    %v487 = vadd.f32 %v404, %v486
    %v488 = vpop.f32.mrb[0].mxu0
    %489 = vmatprep.mubr.f32.mxu0 0.0
    %490 = vmatmul.mubr.f32.gmra.mrb[0].mxu0 %v46
    %v491 = vpop.f32.mrb[0].mxu0
    %v492 = vadd.f32 %v404, %v491
    %v493 = vpop.f32.mrb[0].mxu0
    %494 = vmatprep.mubr.f32.mxu0 0.0
    %495 = vmatmul.mubr.f32.gmra.mrb[0].mxu0 %v47
    %v496 = vpop.f32.mrb[0].mxu0
    %v497 = vadd.f32 %v404, %v496
    %v498 = vpop.f32.mrb[0].mxu0
    %499 = vmatprep.mubr.f32.mxu0 0.0
    %500 = vmatmul.mubr.f32.gmra.mrb[0].mxu0 %v48
    %v501 = vpop.f32.mrb[0].mxu0
    %v502 = vadd.f32 %v404, %v501
    %v503 = vpop.f32.mrb[0].mxu0
    %504 = vmatprep.mubr.f32.mxu0 0.0
    %505 = vmatmul.mubr.f32.gmra.mrb[0].mxu0 %v49
    %v506 = vpop.f32.mrb[0].mxu0
    %v507 = vadd.f32 %v404, %v506
    %v508 = vpop.f32.mrb[0].mxu0
    %509 = vmatprep.mubr.f32.mxu0 0.0
    %510 = vmatmul.mubr.f32.gmra.mrb[0].mxu0 %v50
    %v511 = vpop.f32.mrb[0].mxu0
    %v512 = vadd.f32 %v404, %v511
    %v513 = vpop.f32.mrb[0].mxu0
    %514 = vmatprep.mubr.f32.mxu0 0.0
    %515 = vmatmul.mubr.f32.gmra.mrb[0].mxu0 %v51
    %v516 = vpop.f32.mrb[0].mxu0
    %v517 = vadd.f32 %v404, %v516
    %v518 = vpop.f32.mrb[0].mxu0
    %519 = vmatprep.mubr.f32.mxu0 0.0
    %520 = vmatmul.mubr.f32.gmra.mrb[0].mxu0 %v52
    %v521 = vpop.f32.mrb[0].mxu0
    %v522 = vadd.f32 %v404, %v521
    %v523 = vpop.f32.mrb[0].mxu0
    %524 = vmatprep.mubr.f32.mxu0 0.0
    %525 = vmatmul.mubr.f32.gmra.mrb[0].mxu0 %v53
    %v526 = vpop.f32.mrb[0].mxu0
    %v527 = vadd.f32 %v404, %v526
    %v528 = vpop.f32.mrb[0].mxu0
    %529 = vmatprep.mubr.f32.mxu0 0.0
    %530 = vmatmul.mubr.f32.gmra.mrb[0].mxu0 %v54
    %v531 = vpop.f32.mrb[0].mxu0
    %v532 = vadd.f32 %v404, %v531
    %v533 = vpop.f32.mrb[0].mxu0
    %534 = vmatprep.mubr.f32.mxu0 0.0
    %535 = vmatmul.mubr.f32.gmra.mrb[0].mxu0 %v55
    %v536 = vpop.f32.mrb[0].mxu0
    %v537 = vadd.f32 %v404, %v536
    %v538 = vpop.f32.mrb[0].mxu0
    %539 = vmatprep.mubr.f32.mxu0 0.0
    %540 = vmatmul.mubr.f32.gmra.mrb[0].mxu0 %v56
    %v541 = vpop.f32.mrb[0].mxu0
    %v542 = vadd.f32 %v404, %v541
    %v543 = vpop.f32.mrb[0].mxu0
    %544 = vmatprep.mubr.f32.mxu0 0.0
    %545 = vmatmul.mubr.f32.gmra.mrb[0].mxu0 %v57
    %v546 = vpop.f32.mrb[0].mxu0
    %v547 = vadd.f32 %v404, %v546
    %v548 = vpop.f32.mrb[0].mxu0
    %549 = vdwg.mxu0
    %550 = vst [vmem:[%s3] sm:$0xff] %v472
    %551 = vst [vmem:[%s3 + $0x8] sm:$0xff] %v477
    %552 = vst [vmem:[%s3 + $0x10] sm:$0xff] %v482
    %553 = vst [vmem:[%s3 + $0x18] sm:$0xff] %v487
    %554 = vst [vmem:[%s3 + $0x20] sm:$0xff] %v492
    %555 = vst [vmem:[%s3 + $0x28] sm:$0xff] %v497
    %556 = vst [vmem:[%s3 + $0x30] sm:$0xff] %v502
    %557 = vst [vmem:[%s3 + $0x38] sm:$0xff] %v507
    %558 = vst [vmem:[%s3 + $0x40] sm:$0xff] %v512
    %559 = vst [vmem:[%s3 + $0x48] sm:$0xff] %v517
    %560 = vst [vmem:[%s3 + $0x50] sm:$0xff] %v522
    %561 = vst [vmem:[%s3 + $0x58] sm:$0xff] %v527
    %562 = vst [vmem:[%s3 + $0x60] sm:$0xff] %v532
    %563 = vst [vmem:[%s3 + $0x68] sm:$0xff] %v537
    %564 = vst [vmem:[%s3 + $0x70] sm:$0xff] %v542
    %565 = vst [vmem:[%s3 + $0x78] sm:$0xff] %v547
    // Predicated region
    $region22: #{gcn_forward.1} parent=1 // pred_check
      _
    $region23: #{gcn_forward.1} parent=1 // pred_check_branch
      %567 = sbr.rel (0) target = $region25
    $region24: #{gcn_forward.1} parent=1 // pred_region
      _
    $region25: #{gcn_forward.1} parent=1 // pred_fallthru
      _
    // Predicated region
    $region26: #{gcn_forward.1} parent=1 // pred_check
      _
    $region27: #{gcn_forward.1} parent=1 // pred_check_branch
      %569 = sbr.rel (0) target = $region29
    $region28: #{gcn_forward.1} parent=1 // pred_region
      _
    $region29: #{gcn_forward.1} parent=1 // pred_fallthru
      _
    %570 = vsyncpa [#allocation3], 1
    %571 = vsyncpa [#allocation5], 1

</llo_original>
